<compile_context>
chip_gen: v7x
topology: tpu7x:2x2x1
jax: 0.10.0
libtpu: 0.0.40
codegen_flags: <defaults>
</compile_context>

<pallas_src>
import functools

import jax
import jax.numpy as jnp
from jax import lax
from jax.experimental import pallas as pl
from jax.experimental.pallas import tpu as pltpu


def _prompt_kernel(ctx_ref, img_ref, prefix_ref, suffix_ref, out_ref, *, n_ctx):
    """One (class-tile, batch) step: build TC prompt sequences for one image.

    Block shapes seen by the kernel:
      ctx_ref:    (n_ctx, D)            single-buffered, resident whole grid
      img_ref:    (1, n_ctx, D)         indexed by batch b (inner grid axis)
      prefix_ref: (TC, 1, D)            single-buffered, class tile c (outer)
      suffix_ref: (TC, suf_len, D)      single-buffered, class tile c (outer)
      out_ref:    (1, TC, seq_len, D)   indexed by (b, c)
    """
    tc = out_ref.shape[1]

    # SOS prefix -> out[:, :, 0:1, :]
    out_ref[0, :, 0:1, :] = prefix_ref[:, :, :]
    # class-name + EOS suffix -> out[:, :, 1+n_ctx:, :]
    out_ref[0, :, 1 + n_ctx:, :] = suffix_ref[:, :, :]

    # Elementwise hot path: one (n_ctx, D) add per grid step; stored per class
    # with a short loop instead of materializing a (TC, n_ctx, D) broadcast
    # (which would spill through VMEM for CLIP-sized tiles).
    body = ctx_ref[:, :] + img_ref[0, :, :]          # (n_ctx, D)

    if tc <= 8:
        for i in range(tc):
            out_ref[0, i, 1:1 + n_ctx, :] = body
    else:
        def _store_one(i, carry):
            out_ref[0, i, 1:1 + n_ctx, :] = body
            return carry
        lax.fori_loop(0, tc, _store_one, 0, unroll=4)


def _vmem_budget_and_limit():
    """Per-generation VMEM budget (tile picker) and scoped vmem limit."""
    phys = None
    try:
        phys = pltpu.get_tpu_info().vmem_capacity_bytes
    except Exception:
        phys = None
    if phys is None:
        phys = 64 * 1024 * 1024          # conservative (v7x per-core size)
    if phys >= 96 * 1024 * 1024:         # v5e / v6e: 128 MiB physical VMEM
        return 72 * 1024 * 1024, 96 * 1024 * 1024
    # v7x: 64 MiB per TensorCore; keep ~16 MiB headroom for compiler scratch.
    return 40 * 1024 * 1024, 48 * 1024 * 1024


def _pick_class_tile(n_cls, batch, n_ctx, seq_len, suf_len, d, itemsize,
                     budget_bytes):
    """Pick class-tile TC and (possibly padded) class count from a VMEM budget.

    Per-class bytes per grid step, with ctx/prefix/suffix single-buffered and
    out/img double-buffered:
        out: 2*seq_len*d, suffix: suf_len*d, prefix: 1*d
    plus a fixed term for ctx (1 buffer) + img_prompts (2 buffers).
    """
    fixed = (n_ctx + 2 * n_ctx) * d * itemsize
    per_class = (2 * seq_len + suf_len + 1) * d * itemsize
    cap = max(1, int((budget_bytes - fixed) // max(per_class, 1)))
    if batch == 1 and n_cls > 1:
        # Keep >= 2 class tiles so both v7x TensorCores get grid work even
        # when the batch axis cannot provide parallel steps.
        cap = min(cap, max(1, n_cls // 2))
    if cap >= n_cls:
        return n_cls, n_cls
    # Option A: largest divisor of n_cls that fits.
    tc_div = cap
    while n_cls % tc_div:
        tc_div -= 1
    steps_div = n_cls // tc_div
    # Option B: pad the class axis up to a multiple of cap.
    n_cls_pad = ((n_cls + cap - 1) // cap) * cap
    steps_pad = n_cls_pad // cap
    if steps_div <= steps_pad:
        return tc_div, n_cls
    return cap, n_cls_pad


def prompt_learner_forward(ctx, img_prompts, token_prefix, token_suffix, *,
                           out_dtype=None, classes_per_tile=None,
                           vmem_budget_bytes=None, vmem_limit_bytes=None):
    """Pallas implementation of PromptLearner.forward (class_token_position='end')."""
    assert ctx.ndim == 2, "generic (non-CSC) context expected"
    n_ctx, ctx_dim = ctx.shape
    batch = img_prompts.shape[0]
    n_cls = token_prefix.shape[0]
    suf_len = token_suffix.shape[1]
    seq_len = 1 + n_ctx + suf_len

    # Optional dtype narrowing (e.g. bf16) — kernel is HBM-write-bound, so
    # halving bytes/elem is a ~2x wall-clock win when the consumer allows it.
    if out_dtype is not None:
        ctx = ctx.astype(out_dtype)
        img_prompts = img_prompts.astype(out_dtype)
        token_prefix = token_prefix.astype(out_dtype)
        token_suffix = token_suffix.astype(out_dtype)
    out_dtype = ctx.dtype
    itemsize = jnp.dtype(out_dtype).itemsize

    default_budget, default_limit = _vmem_budget_and_limit()
    if vmem_budget_bytes is None:
        vmem_budget_bytes = default_budget
    if vmem_limit_bytes is None:
        vmem_limit_bytes = default_limit

    if classes_per_tile is not None:
        tc = classes_per_tile
        assert n_cls % tc == 0, "classes_per_tile must divide n_cls"
        n_cls_pad = n_cls
    else:
        tc, n_cls_pad = _pick_class_tile(
            n_cls, batch, n_ctx, seq_len, suf_len, ctx_dim, itemsize,
            vmem_budget_bytes)

    if n_cls_pad != n_cls:
        cls_pad = n_cls_pad - n_cls
        token_prefix = jnp.pad(token_prefix, ((0, cls_pad), (0, 0), (0, 0)))
        token_suffix = jnp.pad(token_suffix, ((0, cls_pad), (0, 0), (0, 0)))

    kernel = functools.partial(_prompt_kernel, n_ctx=n_ctx)

    out = pl.pallas_call(
        kernel,
        out_shape=jax.ShapeDtypeStruct((batch, n_cls_pad, seq_len, ctx_dim),
                                       out_dtype),
        grid_spec=pltpu.PrefetchScalarGridSpec(
            num_scalar_prefetch=0,
            # class-tile axis outer, batch axis inner -> prefix/suffix blocks
            # stay resident in VMEM across the inner batch loop.
            grid=(n_cls_pad // tc, batch),
            in_specs=[
                # shared learned context: never changes -> single buffer
                pl.BlockSpec((n_ctx, ctx_dim), lambda c, b: (0, 0),
                             pipeline_mode=pl.Buffered(1)),
                # per-image prompt offsets (changes every inner step)
                pl.BlockSpec((1, n_ctx, ctx_dim), lambda c, b: (b, 0, 0)),
                # per-class-tile prefix/suffix: batch-invariant -> single buffer
                pl.BlockSpec((tc, 1, ctx_dim), lambda c, b: (c, 0, 0),
                             pipeline_mode=pl.Buffered(1)),
                pl.BlockSpec((tc, suf_len, ctx_dim), lambda c, b: (c, 0, 0),
                             pipeline_mode=pl.Buffered(1)),
            ],
            out_specs=pl.BlockSpec(
                (1, tc, seq_len, ctx_dim), lambda c, b: (b, c, 0, 0)
            ),
        ),
        compiler_params=pltpu.CompilerParams(
            # Output blocks are disjoint along both axes, so both may be
            # megacore-sharded; per-core iteration order still keeps the
            # single-buffered suffix resident across its batch steps.
            dimension_semantics=("parallel", "parallel"),
            vmem_limit_bytes=vmem_limit_bytes,
        ),
    )(ctx, img_prompts, token_prefix, token_suffix)

    if n_cls_pad != n_cls:
        out = out[:, :n_cls]
    return out


def reference_forward(ctx, img_prompts, token_prefix, token_suffix):
    """Pure-JAX reference mirroring the PyTorch module exactly."""
    batch = img_prompts.shape[0]
    n_cls = token_prefix.shape[0]
    # ctx.dim() == 2 branch
    c = jnp.broadcast_to(ctx[None], (batch,) + ctx.shape) + img_prompts
    # ctx.dim() == 3 branch (always taken after the add)
    c = jnp.broadcast_to(c[None], (n_cls,) + c.shape)
    c = jnp.swapaxes(c, 0, 1)                              # (B, n_cls, n_ctx, D)
    prefix = jnp.broadcast_to(token_prefix[None], (batch,) + token_prefix.shape)
    suffix = jnp.broadcast_to(token_suffix[None], (batch,) + token_suffix.shape)
    return jnp.concatenate([prefix, c, suffix], axis=2)


def _run_case(batch, n_cls, n_ctx, ctx_dim, seq_len, seed=0, *,
              out_dtype=None, atol=1e-6, rtol=1e-6, **kwargs):
    suf_len = seq_len - 1 - n_ctx
    key = jax.random.PRNGKey(seed)
    k_ctx, k_img, k_pre, k_suf = jax.random.split(key, 4)

    # nn.init.normal_(ctx_vectors, std=0.02)
    ctx = 0.02 * jax.random.normal(k_ctx, (n_ctx, ctx_dim), dtype=jnp.float32)
    # img_prompts produced upstream by a meta-net; synthetic here.
    img_prompts = jax.random.normal(k_img, (batch, n_ctx, ctx_dim), dtype=jnp.float32)
    # TODO(synk): real CLIP tokenizer + token_embedding lookup has no Pallas
    # equivalent here; deterministic random buffers stand in for the embeddings.
    token_prefix = jax.random.normal(k_pre, (n_cls, 1, ctx_dim), dtype=jnp.float32)
    token_suffix = jax.random.normal(k_suf, (n_cls, suf_len, ctx_dim), dtype=jnp.float32)

    out = prompt_learner_forward(ctx, img_prompts, token_prefix, token_suffix,
                                 out_dtype=out_dtype, **kwargs)
    out = jax.block_until_ready(out)

    if out_dtype is not None:
        ref = reference_forward(ctx.astype(out_dtype),
                                img_prompts.astype(out_dtype),
                                token_prefix.astype(out_dtype),
                                token_suffix.astype(out_dtype))
    else:
        ref = reference_forward(ctx, img_prompts, token_prefix, token_suffix)

    assert out.shape == (batch, n_cls, seq_len, ctx_dim), out.shape
    assert jnp.allclose(out.astype(jnp.float32), ref.astype(jnp.float32),
                        atol=atol, rtol=rtol), "mismatch vs reference"


if __name__ == "__main__":
    # Small, shape-consistent synthetic configurations (CLIP uses D=512, seq=77).
    # Case 1: lane-dense embedding dim (multiple of 128) — the fast path.
    _run_case(batch=2, n_cls=8, n_ctx=4, ctx_dim=128, seq_len=16, seed=0)
    # Case 2: narrow, non-128-multiple embedding dim (masked stores, no pad/slice).
    _run_case(batch=2, n_cls=4, n_ctx=4, ctx_dim=32, seq_len=16, seed=0)
    # Case 3: prime n_cls under a tight budget exercises the class-padding path
    # and single-buffered prefix/suffix residency across multiple class tiles.
    _run_case(batch=2, n_cls=7, n_ctx=4, ctx_dim=128, seq_len=16, seed=1,
              vmem_budget_bytes=80_000)
    # Case 4: bf16 emission path (HBM-write-bound -> ~2x fewer bytes).
    _run_case(batch=2, n_cls=8, n_ctx=4, ctx_dim=128, seq_len=16, seed=2,
              out_dtype=jnp.bfloat16, atol=5e-2, rtol=5e-2)

    print("KERNEL_OK")
</pallas_src>

<mosaic_0001>
module attributes {stable_mosaic.version = 11 : i64} {
  func.func @_prompt_kernel(%arg0: i32, %arg1: i32, %arg2: memref<4x128xf32, #tpu.memory_space<vmem>>, %arg3: memref<1x4x128xf32, #tpu.memory_space<vmem>>, %arg4: memref<8x1x128xf32, #tpu.memory_space<vmem>>, %arg5: memref<8x11x128xf32, #tpu.memory_space<vmem>>, %arg6: memref<1x8x16x128xf32, #tpu.memory_space<vmem>>) attributes {dimension_semantics = [#tpu.dimension_semantics<parallel>, #tpu.dimension_semantics<parallel>], iteration_bounds = array<i64: 1, 2>, scalar_prefetch = 0 : i64, scratch_operands = 0 : i64, tpu.core_type = #tpu.core_type<tc>, window_params = [{pipeline_mode = #tpu.pipeline_mode<synchronous>, transform_indices = @transform_0, window_bounds = array<i64: 4, 128>}, {transform_indices = @transform_1, window_bounds = array<i64: 1, 4, 128>}, {pipeline_mode = #tpu.pipeline_mode<synchronous>, transform_indices = @transform_2, window_bounds = array<i64: 8, 1, 128>}, {pipeline_mode = #tpu.pipeline_mode<synchronous>, transform_indices = @transform_3, window_bounds = array<i64: 8, 11, 128>}, {transform_indices = @transform_4, window_bounds = array<i64: 1, 8, 16, 128>}]} {
    %c0 = arith.constant 0 : index
    %c0_0 = arith.constant 0 : index
    %c0_1 = arith.constant 0 : index
    %0 = vector.load %arg4[%c0, %c0_0, %c0_1] : memref<8x1x128xf32, #tpu.memory_space<vmem>>, vector<8x1x128xf32>
    %c0_2 = arith.constant 0 : index
    %c0_3 = arith.constant 0 : index
    %c0_4 = arith.constant 0 : index
    %c0_5 = arith.constant 0 : index
    %1 = vector.load %arg6[%c0_2, %c0_3, %c0_4, %c0_5] : memref<1x8x16x128xf32, #tpu.memory_space<vmem>>, vector<1x8x1x128xf32>
    %2 = vector.shape_cast %1 : vector<1x8x1x128xf32> to vector<8x1x128xf32>
    %3 = vector.shape_cast %0 : vector<8x1x128xf32> to vector<1x8x1x128xf32>
    tpu.vector_store %arg6[%c0_2, %c0_3, %c0_4, %c0_5], %3 {strides = array<i32>} : memref<1x8x16x128xf32, #tpu.memory_space<vmem>>, vector<1x8x1x128xf32>,
    %c0_6 = arith.constant 0 : index
    %c0_7 = arith.constant 0 : index
    %c0_8 = arith.constant 0 : index
    %4 = vector.load %arg5[%c0_6, %c0_7, %c0_8] : memref<8x11x128xf32, #tpu.memory_space<vmem>>, vector<8x11x128xf32>
    %c0_9 = arith.constant 0 : index
    %c0_10 = arith.constant 0 : index
    %c5 = arith.constant 5 : index
    %c0_11 = arith.constant 0 : index
    %5 = vector.load %arg6[%c0_9, %c0_10, %c5, %c0_11] : memref<1x8x16x128xf32, #tpu.memory_space<vmem>>, vector<1x8x11x128xf32>
    %6 = vector.shape_cast %5 : vector<1x8x11x128xf32> to vector<8x11x128xf32>
    %7 = vector.shape_cast %4 : vector<8x11x128xf32> to vector<1x8x11x128xf32>
    tpu.vector_store %arg6[%c0_9, %c0_10, %c5, %c0_11], %7 {strides = array<i32>} : memref<1x8x16x128xf32, #tpu.memory_space<vmem>>, vector<1x8x11x128xf32>,
    %c0_12 = arith.constant 0 : index
    %c0_13 = arith.constant 0 : index
    %8 = vector.load %arg2[%c0_12, %c0_13] : memref<4x128xf32, #tpu.memory_space<vmem>>, vector<4x128xf32>
    %c0_14 = arith.constant 0 : index
    %c0_15 = arith.constant 0 : index
    %c0_16 = arith.constant 0 : index
    %9 = vector.load %arg3[%c0_14, %c0_15, %c0_16] : memref<1x4x128xf32, #tpu.memory_space<vmem>>, vector<1x4x128xf32>
    %10 = vector.shape_cast %9 : vector<1x4x128xf32> to vector<4x128xf32>
    %11 = arith.addf %8, %10 : vector<4x128xf32>
    %c0_17 = arith.constant 0 : index
    %c0_18 = arith.constant 0 : index
    %c1 = arith.constant 1 : index
    %c0_19 = arith.constant 0 : index
    %12 = vector.load %arg6[%c0_17, %c0_18, %c1, %c0_19] : memref<1x8x16x128xf32, #tpu.memory_space<vmem>>, vector<1x1x4x128xf32>
    %13 = vector.shape_cast %12 : vector<1x1x4x128xf32> to vector<4x128xf32>
    %14 = vector.shape_cast %11 : vector<4x128xf32> to vector<1x1x4x128xf32>
    tpu.vector_store %arg6[%c0_17, %c0_18, %c1, %c0_19], %14 {strides = array<i32>} : memref<1x8x16x128xf32, #tpu.memory_space<vmem>>, vector<1x1x4x128xf32>,
    %c0_20 = arith.constant 0 : index
    %c1_21 = arith.constant 1 : index
    %c1_22 = arith.constant 1 : index
    %c0_23 = arith.constant 0 : index
    %15 = vector.load %arg6[%c0_20, %c1_21, %c1_22, %c0_23] : memref<1x8x16x128xf32, #tpu.memory_space<vmem>>, vector<1x1x4x128xf32>
    %16 = vector.shape_cast %15 : vector<1x1x4x128xf32> to vector<4x128xf32>
    %17 = vector.shape_cast %11 : vector<4x128xf32> to vector<1x1x4x128xf32>
    tpu.vector_store %arg6[%c0_20, %c1_21, %c1_22, %c0_23], %17 {strides = array<i32>} : memref<1x8x16x128xf32, #tpu.memory_space<vmem>>, vector<1x1x4x128xf32>,
    %c0_24 = arith.constant 0 : index
    %c2 = arith.constant 2 : index
    %c1_25 = arith.constant 1 : index
    %c0_26 = arith.constant 0 : index
    %18 = vector.load %arg6[%c0_24, %c2, %c1_25, %c0_26] : memref<1x8x16x128xf32, #tpu.memory_space<vmem>>, vector<1x1x4x128xf32>
    %19 = vector.shape_cast %18 : vector<1x1x4x128xf32> to vector<4x128xf32>
    %20 = vector.shape_cast %11 : vector<4x128xf32> to vector<1x1x4x128xf32>
    tpu.vector_store %arg6[%c0_24, %c2, %c1_25, %c0_26], %20 {strides = array<i32>} : memref<1x8x16x128xf32, #tpu.memory_space<vmem>>, vector<1x1x4x128xf32>,
    %c0_27 = arith.constant 0 : index
    %c3 = arith.constant 3 : index
    %c1_28 = arith.constant 1 : index
    %c0_29 = arith.constant 0 : index
    %21 = vector.load %arg6[%c0_27, %c3, %c1_28, %c0_29] : memref<1x8x16x128xf32, #tpu.memory_space<vmem>>, vector<1x1x4x128xf32>
    %22 = vector.shape_cast %21 : vector<1x1x4x128xf32> to vector<4x128xf32>
    %23 = vector.shape_cast %11 : vector<4x128xf32> to vector<1x1x4x128xf32>
    tpu.vector_store %arg6[%c0_27, %c3, %c1_28, %c0_29], %23 {strides = array<i32>} : memref<1x8x16x128xf32, #tpu.memory_space<vmem>>, vector<1x1x4x128xf32>,
    %c0_30 = arith.constant 0 : index
    %c4 = arith.constant 4 : index
    %c1_31 = arith.constant 1 : index
    %c0_32 = arith.constant 0 : index
    %24 = vector.load %arg6[%c0_30, %c4, %c1_31, %c0_32] : memref<1x8x16x128xf32, #tpu.memory_space<vmem>>, vector<1x1x4x128xf32>
    %25 = vector.shape_cast %24 : vector<1x1x4x128xf32> to vector<4x128xf32>
    %26 = vector.shape_cast %11 : vector<4x128xf32> to vector<1x1x4x128xf32>
    tpu.vector_store %arg6[%c0_30, %c4, %c1_31, %c0_32], %26 {strides = array<i32>} : memref<1x8x16x128xf32, #tpu.memory_space<vmem>>, vector<1x1x4x128xf32>,
    %c0_33 = arith.constant 0 : index
    %c5_34 = arith.constant 5 : index
    %c1_35 = arith.constant 1 : index
    %c0_36 = arith.constant 0 : index
    %27 = vector.load %arg6[%c0_33, %c5_34, %c1_35, %c0_36] : memref<1x8x16x128xf32, #tpu.memory_space<vmem>>, vector<1x1x4x128xf32>
    %28 = vector.shape_cast %27 : vector<1x1x4x128xf32> to vector<4x128xf32>
    %29 = vector.shape_cast %11 : vector<4x128xf32> to vector<1x1x4x128xf32>
    tpu.vector_store %arg6[%c0_33, %c5_34, %c1_35, %c0_36], %29 {strides = array<i32>} : memref<1x8x16x128xf32, #tpu.memory_space<vmem>>, vector<1x1x4x128xf32>,
    %c0_37 = arith.constant 0 : index
    %c6 = arith.constant 6 : index
    %c1_38 = arith.constant 1 : index
    %c0_39 = arith.constant 0 : index
    %30 = vector.load %arg6[%c0_37, %c6, %c1_38, %c0_39] : memref<1x8x16x128xf32, #tpu.memory_space<vmem>>, vector<1x1x4x128xf32>
    %31 = vector.shape_cast %30 : vector<1x1x4x128xf32> to vector<4x128xf32>
    %32 = vector.shape_cast %11 : vector<4x128xf32> to vector<1x1x4x128xf32>
    tpu.vector_store %arg6[%c0_37, %c6, %c1_38, %c0_39], %32 {strides = array<i32>} : memref<1x8x16x128xf32, #tpu.memory_space<vmem>>, vector<1x1x4x128xf32>,
    %c0_40 = arith.constant 0 : index
    %c7 = arith.constant 7 : index
    %c1_41 = arith.constant 1 : index
    %c0_42 = arith.constant 0 : index
    %33 = vector.load %arg6[%c0_40, %c7, %c1_41, %c0_42] : memref<1x8x16x128xf32, #tpu.memory_space<vmem>>, vector<1x1x4x128xf32>
    %34 = vector.shape_cast %33 : vector<1x1x4x128xf32> to vector<4x128xf32>
    %35 = vector.shape_cast %11 : vector<4x128xf32> to vector<1x1x4x128xf32>
    tpu.vector_store %arg6[%c0_40, %c7, %c1_41, %c0_42], %35 {strides = array<i32>} : memref<1x8x16x128xf32, #tpu.memory_space<vmem>>, vector<1x1x4x128xf32>,
    return
  }
  func.func @transform_0(%arg0: i32, %arg1: i32) -> (i32, i32) {
    %c0_i32 = arith.constant 0 : i32
    %c0_i32_0 = arith.constant 0 : i32
    %c0_i32_1 = arith.constant 0 : i32
    return %c0_i32, %c0_i32_0 : i32, i32
  }
  func.func @transform_1(%arg0: i32, %arg1: i32) -> (i32, i32, i32) {
    %c0_i32 = arith.constant 0 : i32
    %c0_i32_0 = arith.constant 0 : i32
    %c0_i32_1 = arith.constant 0 : i32
    return %arg1, %c0_i32, %c0_i32_0 : i32, i32, i32
  }
  func.func @transform_2(%arg0: i32, %arg1: i32) -> (i32, i32, i32) {
    %c0_i32 = arith.constant 0 : i32
    %c0_i32_0 = arith.constant 0 : i32
    %c0_i32_1 = arith.constant 0 : i32
    return %arg0, %c0_i32, %c0_i32_0 : i32, i32, i32
  }
  func.func @transform_3(%arg0: i32, %arg1: i32) -> (i32, i32, i32) {
    %c0_i32 = arith.constant 0 : i32
    %c0_i32_0 = arith.constant 0 : i32
    %c0_i32_1 = arith.constant 0 : i32
    return %arg0, %c0_i32, %c0_i32_0 : i32, i32, i32
  }
  func.func @transform_4(%arg0: i32, %arg1: i32) -> (i32, i32, i32, i32) {
    %c0_i32 = arith.constant 0 : i32
    %c0_i32_0 = arith.constant 0 : i32
    %c0_i32_1 = arith.constant 0 : i32
    return %arg1, %arg0, %c0_i32, %c0_i32_0 : i32, i32, i32, i32
  }
}

</mosaic_0001>

<llo_original>
// kernel: tpu_custom_call.1
$region0: #{tpu_custom_call.1}
  #allocation0 [shape = 'u32[]', space=smem, size = 0x4, offset = 0x4, fixed_abs, tag = 'smem constant byte address 0x4 - core index']
  #allocation1 [shape = 'u32[144,128]{1,0:T(1,128)}', space=vmem, size = 0x12000, scoped, tag = 'internal scratch']
  %s0 = inlined_call_operand.vmem [shape: f32[4,128], index: 0, kind: input, shape index: {}]
  %s1 = inlined_call_operand.vmem [shape: f32[2,4,128], index: 1, kind: input, shape index: {}]
  %s2 = inlined_call_operand.vmem [shape: f32[8,1,128], index: 2, kind: input, shape index: {}]
  %s3 = inlined_call_operand.vmem [shape: f32[8,11,128], index: 3, kind: input, shape index: {}]
  %s4 = inlined_call_operand.hbm [shape: f32[2,8,16,128], index: 4, kind: output, shape index: {}]
  %s5 = sld [smem:[#allocation0]]
  $region49: #{tpu_custom_call.1} parent=0
    _
  %s7 = ssub.s32 1, %s5
  %s8 = scalar_select 0, %s7, %s5
  $region1: #{tpu_custom_call.1} parent=0
    #allocation2 [shape = 'u8[131072]{0}', space=vmem, size = 0x20000, scoped, tag = 'output window, operand 0']
    #allocation3 [shape = 's32[2]{0}', space=sflag, size = 0x8, scoped, tag = 'scoped memory for tpu_custom_call.1']
    %9 = vsyncpa [#allocation3], 0
    %s10 = scalar_lea.sflag [#allocation3], 1
    %11 = vsyncpa %s10, 0
    loop: start=0, step=1, limit=4
    $region2: #{tpu_custom_call.1} parent=1 // loop_pre_header
      _
    $region3: #{tpu_custom_call.1} parent=1 // loop_header
      %s13 = sphi 0, %s17
      %p14 = scmp.ge.s32.totalorder %s13, 4
      %s20 = sphi 0, %s32
      %s21 = sphi 0, %s28
      %s22 = sphi 0, %s20
      %s23 = sphi 0, %s21
      %s24 = sphi 0, %s22
      %s25 = sphi 0, %s23
      %s33 = sphi 0, %s33
      %s35 = sphi 0, %s33
      %s36 = sphi 0, %s35
      %s50 = sphi 0, %s36
      %s56 = sphi 0, %s58
      %s59 = sphi 0, %s56
      %s60 = sphi 0, %s59
      %s76 = sphi 0, %s60
      %s82 = sphi 0, %s84
      %s85 = sphi 0, %s82
      %s86 = sphi 0, %s85
      %s102 = sphi 0, %s86
      %s108 = sphi 0, %s110
      %s111 = sphi 0, %s108
      %s112 = sphi 0, %s111
      %s128 = sphi 0, %s112
      %s136 = sphi 0, %s138
      %s139 = sphi 0, %s136
      %s140 = sphi 0, %s139
      %s156 = sphi 0, %s140
    $region4: #{tpu_custom_call.1} parent=1 // loop_header_branch
      %16 = sbr.rel (%p14) target = $region8
    $region5: #{tpu_custom_call.1} parent=1 // loop_body
      %s18 = ssub.s32 %s13, 1
      %s19 = ssub.s32 %s13, 2
      %s26 = sadd.s32 1, %s21
      %p27 = scmp.ge.s32.totalorder %s26, 2
      %s28 = scalar_select %p27, 0, %s26
      %s29 = sadd.s32 1, %s20
      %s30 = scalar_select %p27, %s29, %s20
      %p31 = scmp.ge.s32.totalorder %s30, 1
      %s32 = scalar_select %p31, 0, %s30
      %s34 = sadd.s32 %s33, 1
      %p37 = scmp.eq.s32.totalorder %s13, 1
      %p38 = scmp.ne.s32.totalorder %s33, %s35
      %p39 = scmp.eq.s32.totalorder %s13, 0
      %p40 = por %p38, %p39
      %p41 = scmp.ne.s32.totalorder %s33, %s35
      %p42 = scmp.eq.s32.totalorder %s18, 1
      %p43 = por %p41, %p42
      %p44 = scmp.ne.s32.totalorder %s35, %s36
      %p45 = scmp.eq.s32.totalorder %s18, 0
      %p46 = por %p44, %p45
      %p47 = scmp.ne.s32.totalorder %s35, %s36
      %p48 = scmp.eq.s32.totalorder %s19, 1
      %p49 = por %p47, %p48
      %p51 = scmp.ne.s32.totalorder %s36, %s50
      %p52 = scmp.eq.s32.totalorder %s19, 0
      %p53 = por %p51, %p52
      %s54 = ssub.s32 %s21, %s28
      %p55 = scmp.eq.s32.totalorder %s54, 0
      %s57 = sadd.s32 %s56, 1
      %s58 = scalar_select %p55, %s56, %s57
      %p61 = pneg %p55
      %p62 = scmp.eq.s32.totalorder %s13, 1
      %p63 = por %p61, %p62
      %p64 = scmp.ne.s32.totalorder %s56, %s59
      %p65 = scmp.eq.s32.totalorder %s13, 0
      %p66 = por %p64, %p65
      %p67 = scmp.ne.s32.totalorder %s56, %s59
      %p68 = scmp.eq.s32.totalorder %s18, 1
      %p69 = por %p67, %p68
      %p70 = scmp.ne.s32.totalorder %s59, %s60
      %p71 = scmp.eq.s32.totalorder %s18, 0
      %p72 = por %p70, %p71
      %p73 = scmp.ne.s32.totalorder %s59, %s60
      %p74 = scmp.eq.s32.totalorder %s19, 1
      %p75 = por %p73, %p74
      %p77 = scmp.ne.s32.totalorder %s60, %s76
      %p78 = scmp.eq.s32.totalorder %s19, 0
      %p79 = por %p77, %p78
      %s80 = ssub.s32 %s20, %s32
      %p81 = scmp.eq.s32.totalorder %s80, 0
      %s83 = sadd.s32 %s82, 1
      %s84 = scalar_select %p81, %s82, %s83
      %p87 = pneg %p81
      %p88 = scmp.eq.s32.totalorder %s13, 1
      %p89 = por %p87, %p88
      %p90 = scmp.ne.s32.totalorder %s82, %s85
      %p91 = scmp.eq.s32.totalorder %s13, 0
      %p92 = por %p90, %p91
      %p93 = scmp.ne.s32.totalorder %s82, %s85
      %p94 = scmp.eq.s32.totalorder %s18, 1
      %p95 = por %p93, %p94
      %p96 = scmp.ne.s32.totalorder %s85, %s86
      %p97 = scmp.eq.s32.totalorder %s18, 0
      %p98 = por %p96, %p97
      %p99 = scmp.ne.s32.totalorder %s85, %s86
      %p100 = scmp.eq.s32.totalorder %s19, 1
      %p101 = por %p99, %p100
      %p103 = scmp.ne.s32.totalorder %s86, %s102
      %p104 = scmp.eq.s32.totalorder %s19, 0
      %p105 = por %p103, %p104
      %s106 = ssub.s32 %s20, %s32
      %p107 = scmp.eq.s32.totalorder %s106, 0
      %s109 = sadd.s32 %s108, 1
      %s110 = scalar_select %p107, %s108, %s109
      %p113 = pneg %p107
      %p114 = scmp.eq.s32.totalorder %s13, 1
      %p115 = por %p113, %p114
      %p116 = scmp.ne.s32.totalorder %s108, %s111
      %p117 = scmp.eq.s32.totalorder %s13, 0
      %p118 = por %p116, %p117
      %p119 = scmp.ne.s32.totalorder %s108, %s111
      %p120 = scmp.eq.s32.totalorder %s18, 1
      %p121 = por %p119, %p120
      %p122 = scmp.ne.s32.totalorder %s111, %s112
      %p123 = scmp.eq.s32.totalorder %s18, 0
      %p124 = por %p122, %p123
      %p125 = scmp.ne.s32.totalorder %s111, %s112
      %p126 = scmp.eq.s32.totalorder %s19, 1
      %p127 = por %p125, %p126
      %p129 = scmp.ne.s32.totalorder %s112, %s128
      %p130 = scmp.eq.s32.totalorder %s19, 0
      %p131 = por %p129, %p130
      %s132 = ssub.s32 %s21, %s28
      %s133 = ssub.s32 %s20, %s32
      %s134 = sor.u32 %s132, %s133
      %p135 = scmp.eq.s32.totalorder %s134, 0
      %s137 = sadd.s32 %s136, 1
      %s138 = scalar_select %p135, %s136, %s137
      %p141 = pneg %p135
      %p142 = scmp.eq.s32.totalorder %s13, 1
      %p143 = por %p141, %p142
      %p144 = scmp.ne.s32.totalorder %s136, %s139
      %p145 = scmp.eq.s32.totalorder %s13, 0
      %p146 = por %p144, %p145
      %p147 = scmp.ne.s32.totalorder %s136, %s139
      %p148 = scmp.eq.s32.totalorder %s18, 1
      %p149 = por %p147, %p148
      %p150 = scmp.ne.s32.totalorder %s139, %s140
      %p151 = scmp.eq.s32.totalorder %s18, 0
      %p152 = por %p150, %p151
      %p153 = scmp.ne.s32.totalorder %s139, %s140
      %p154 = scmp.eq.s32.totalorder %s19, 1
      %p155 = por %p153, %p154
      %p157 = scmp.ne.s32.totalorder %s140, %s156
      %p158 = scmp.eq.s32.totalorder %s19, 0
      %p159 = por %p157, %p158
      %p160 = scmp.le.s32.totalorder 1, %s13
      %p161 = scmp.lt.s32.totalorder %s13, 3
      %p162 = pnand %p160, %p161
      %p163 = pneg %p162
      // Predicated region
      $region9: #{tpu_custom_call.1} parent=5 // pred_check
        _
      $region10: #{tpu_custom_call.1} parent=5 // pred_check_branch
        %165 = sbr.rel (%p162) target = $region12
      $region11: #{tpu_custom_call.1} parent=5 // pred_region
        %s166 = ssub.s32 %s13, 1
        // Predicated region
        $region13: #{tpu_custom_call.1} parent=11 // pred_check
          %p167 = pneg %p46
        $region14: #{tpu_custom_call.1} parent=11 // pred_check_branch
          %169 = sbr.rel (%p167) target = $region16
        $region15: #{tpu_custom_call.1} parent=11 // pred_region
          _
        $region16: #{tpu_custom_call.1} parent=11 // pred_fallthru
          _
        // Predicated region
        $region17: #{tpu_custom_call.1} parent=11 // pred_check
          %p170 = pneg %p98
        $region18: #{tpu_custom_call.1} parent=11 // pred_check_branch
          %172 = sbr.rel (%p170) target = $region20
        $region19: #{tpu_custom_call.1} parent=11 // pred_region
          %s173 = smul.u32 8, %s22
          %p174 = scmp.lt.s32.totalorder %s173, 7
          %s175 = scalar_select %p174, %s173, 7
          %s176 = scalar_lea.vmem %s2, %s175
          %s177 = smul.u32 8, %s22
        $region20: #{tpu_custom_call.1} parent=11 // pred_fallthru
          _
        // Predicated region
        $region21: #{tpu_custom_call.1} parent=11 // pred_check
          %p178 = pneg %p124
        $region22: #{tpu_custom_call.1} parent=11 // pred_check_branch
          %180 = sbr.rel (%p178) target = $region24
        $region23: #{tpu_custom_call.1} parent=11 // pred_region
          %s181 = smul.u32 8, %s22
          %p182 = scmp.lt.s32.totalorder %s181, 7
          %s183 = scalar_select %p182, %s181, 7
          %s184 = smul.addr %s183, 2
          %s185 = smul.addr %s184, 8
          %s186 = scalar_lea.vmem %s3, %s185
          %s187 = smul.u32 8, %s22
        $region24: #{tpu_custom_call.1} parent=11 // pred_fallthru
          _
      $region12: #{tpu_custom_call.1} parent=5 // pred_fallthru
        _
      %p188 = scmp.lt.s32.totalorder %s13, 2
      // Predicated region
      $region25: #{tpu_custom_call.1} parent=5 // pred_check
        %p189 = pneg %p188
      $region26: #{tpu_custom_call.1} parent=5 // pred_check_branch
        %191 = sbr.rel (%p189) target = $region28
      $region27: #{tpu_custom_call.1} parent=5 // pred_region
        // Predicated region
        $region29: #{tpu_custom_call.1} parent=27 // pred_check
          %p192 = pneg %p66
        $region30: #{tpu_custom_call.1} parent=27 // pred_check_branch
          %194 = sbr.rel (%p192) target = $region32
        $region31: #{tpu_custom_call.1} parent=27 // pred_region
          %p195 = scmp.lt.s32.totalorder %s21, 1
          %s196 = scalar_select %p195, %s21, 1
          %s197 = smul.addr %s196, 4
          %s198 = scalar_lea.vmem %s1, %s197
        $region32: #{tpu_custom_call.1} parent=27 // pred_fallthru
          _
      $region28: #{tpu_custom_call.1} parent=5 // pred_fallthru
        _
      %p199 = scmp.le.s32.totalorder 1, %s13
      %p200 = scmp.lt.s32.totalorder %s13, 3
      %p201 = pnand %p199, %p200
      %p202 = pneg %p201
      // Predicated region
      $region33: #{tpu_custom_call.1} parent=5 // pred_check
        _
      $region34: #{tpu_custom_call.1} parent=5 // pred_check_branch
        %204 = sbr.rel (%p201) target = $region36
      $region35: #{tpu_custom_call.1} parent=5 // pred_region
        %s205 = ssub.s32 %s13, 1
        %p206 = pneg %p46
        %p207 = pneg %p43
        %p208 = scmp.lt.s32.totalorder %s23, 1
        %s209 = scalar_select %p208, %s23, 1
        %s210 = smul.addr %s209, 4
        %s211 = scalar_lea.vmem %s1, %s210
        %p212 = pneg %p72
        %p213 = pneg %p69
        %s214 = smul.u32 8, %s22
        %p215 = scmp.lt.s32.totalorder %s214, 7
        %s216 = scalar_select %p215, %s214, 7
        %s217 = scalar_lea.vmem %s2, %s216
        %p218 = pneg %p98
        %p219 = pneg %p95
        %s220 = smul.u32 8, %s22
        %p221 = scmp.lt.s32.totalorder %s220, 7
        %s222 = scalar_select %p221, %s220, 7
        %s223 = smul.addr %s222, 2
        %s224 = smul.addr %s223, 8
        %s225 = scalar_lea.vmem %s3, %s224
        %p226 = pneg %p124
        %p227 = pneg %p121
        %p228 = pneg %p152
        %p229 = pneg %p149
        %s230 = sand.u32 %s139, 1
        %s231 = scalar_lea.sflag [#allocation3], %s230
        %s232 = sand.u32 %s139, 1
        %s233 = smul.addr %s232, 128
        %s234 = scalar_lea.vmem [#allocation2], %s233
        %p235 = scmp.lt.s32.totalorder %s23, 1
        %s236 = scalar_select %p235, %s23, 1
        %s237 = smul.addr %s236, 4
        %s238 = scalar_lea.vmem %s1, %s237
        %s239 = smul.u32 8, %s22
        %p240 = scmp.lt.s32.totalorder %s239, 7
        %s241 = scalar_select %p240, %s239, 7
        %s242 = scalar_lea.vmem %s2, %s241
        %s243 = smul.u32 8, %s22
        %s244 = smul.u32 8, %s22
        %p245 = scmp.lt.s32.totalorder %s244, 7
        %s246 = scalar_select %p245, %s244, 7
        %s247 = smul.addr %s246, 2
        %s248 = smul.addr %s247, 8
        %s249 = scalar_lea.vmem %s3, %s248
        %s250 = smul.u32 8, %s22
        %s251 = smul.u32 8, %s22
        %v252 = vld [vmem:[%s242] sm:$0x1]
        %v253 = vld [vmem:[%s242 + $0x1] sm:$0x1]
        %v254 = vld [vmem:[%s242 + $0x2] sm:$0x1]
        %v255 = vld [vmem:[%s242 + $0x3] sm:$0x1]
        %v256 = vld [vmem:[%s242 + $0x4] sm:$0x1]
        %v257 = vld [vmem:[%s242 + $0x5] sm:$0x1]
        %v258 = vld [vmem:[%s242 + $0x6] sm:$0x1]
        %v259 = vld [vmem:[%s242 + $0x7] sm:$0x1]
        %260 = vst [vmem:[%s234] sm:$0x1] %v252
        %261 = vst [vmem:[%s234 + $0x10] sm:$0x1] %v253
        %262 = vst [vmem:[%s234 + $0x20] sm:$0x1] %v254
        %263 = vst [vmem:[%s234 + $0x30] sm:$0x1] %v255
        %264 = vst [vmem:[%s234 + $0x40] sm:$0x1] %v256
        %265 = vst [vmem:[%s234 + $0x50] sm:$0x1] %v257
        %266 = vst [vmem:[%s234 + $0x60] sm:$0x1] %v258
        %267 = vst [vmem:[%s234 + $0x70] sm:$0x1] %v259
        %v268 = vld [vmem:[%s249] sm:$0xff]
        %v269 = vld [vmem:[%s249 + $0x8] sm:$0x7]
        %v270 = vld [vmem:[%s249 + $0x10] sm:$0xff]
        %v271 = vld [vmem:[%s249 + $0x18] sm:$0x7]
        %v272 = vld [vmem:[%s249 + $0x20] sm:$0xff]
        %v273 = vld [vmem:[%s249 + $0x28] sm:$0x7]
        %v274 = vld [vmem:[%s249 + $0x30] sm:$0xff]
        %v275 = vld [vmem:[%s249 + $0x38] sm:$0x7]
        %v276 = vld [vmem:[%s249 + $0x40] sm:$0xff]
        %v277 = vld [vmem:[%s249 + $0x48] sm:$0x7]
        %v278 = vld [vmem:[%s249 + $0x50] sm:$0xff]
        %v279 = vld [vmem:[%s249 + $0x58] sm:$0x7]
        %v280 = vld [vmem:[%s249 + $0x60] sm:$0xff]
        %v281 = vld [vmem:[%s249 + $0x68] sm:$0x7]
        %v282 = vld [vmem:[%s249 + $0x70] sm:$0xff]
        %v283 = vld [vmem:[%s249 + $0x78] sm:$0x7]
        %284 = vst [vmem:[%s234 + $0x5] sm:$0xff] %v268
        %285 = vst [vmem:[%s234 + $0xd] sm:$0x7] %v269
        %286 = vst [vmem:[%s234 + $0x15] sm:$0xff] %v270
        %287 = vst [vmem:[%s234 + $0x1d] sm:$0x7] %v271
        %288 = vst [vmem:[%s234 + $0x25] sm:$0xff] %v272
        %289 = vst [vmem:[%s234 + $0x2d] sm:$0x7] %v273
        %290 = vst [vmem:[%s234 + $0x35] sm:$0xff] %v274
        %291 = vst [vmem:[%s234 + $0x3d] sm:$0x7] %v275
        %292 = vst [vmem:[%s234 + $0x45] sm:$0xff] %v276
        %293 = vst [vmem:[%s234 + $0x4d] sm:$0x7] %v277
        %294 = vst [vmem:[%s234 + $0x55] sm:$0xff] %v278
        %295 = vst [vmem:[%s234 + $0x5d] sm:$0x7] %v279
        %296 = vst [vmem:[%s234 + $0x65] sm:$0xff] %v280
        %297 = vst [vmem:[%s234 + $0x6d] sm:$0x7] %v281
        %298 = vst [vmem:[%s234 + $0x75] sm:$0xff] %v282
        %299 = vst [vmem:[%s234 + $0x7d] sm:$0x7] %v283
        %v300 = vld [vmem:[%s0] sm:$0xf]
        %v301 = vld [vmem:[%s238] sm:$0xf]
        %v302 = vadd.f32 %v300, %v301
        %303 = vst [vmem:[%s234 + $0x1] sm:$0xf] %v302
        %s304 = scalar_lea.vmem %s234, 16 [#allocation2]
        %305 = vst [vmem:[%s304 + $0x1] sm:$0xf] %v302
        %s306 = scalar_lea.vmem %s234, 32 [#allocation2]
        %307 = vst [vmem:[%s306 + $0x1] sm:$0xf] %v302
        %s308 = scalar_lea.vmem %s234, 48 [#allocation2]
        %309 = vst [vmem:[%s308 + $0x1] sm:$0xf] %v302
        %s310 = scalar_lea.vmem %s234, 64 [#allocation2]
        %311 = vst [vmem:[%s310 + $0x1] sm:$0xf] %v302
        %s312 = scalar_lea.vmem %s234, 80 [#allocation2]
        %313 = vst [vmem:[%s312 + $0x1] sm:$0xf] %v302
        %s314 = scalar_lea.vmem %s234, 96 [#allocation2]
        %315 = vst [vmem:[%s314 + $0x1] sm:$0xf] %v302
        %s316 = scalar_lea.vmem %s234, 112 [#allocation2]
        %317 = vst [vmem:[%s316 + $0x1] sm:$0xf] %v302
        %s318 = sand.u32 %s139, 1
        %s319 = scalar_lea.sflag [#allocation3], %s318
        %s320 = sand.u32 %s139, 1
        %s321 = smul.addr %s320, 128
        %s322 = scalar_lea.vmem [#allocation2], %s321
        // Predicated region
        $region37: #{tpu_custom_call.1} parent=35 // pred_check
          %p323 = pneg %p149
        $region38: #{tpu_custom_call.1} parent=35 // pred_check_branch
          %325 = sbr.rel (%p323) target = $region40
        $region39: #{tpu_custom_call.1} parent=35 // pred_region
          %s326 = smul.u32 8, %s22
          %s328 = ssub.s32 2048, 2048
          %329 = vsyncadd %s319, %s328
          %s330 = smul.addr %s326, 2
          %s331 = smul.addr %s23, 16
          %s332 = sadd.s32 %s330, %s331
          %s333 = smul.addr %s332, 128
          %s334 = scalar_lea.hbm %s4, %s333
          %s335 = sshll.u32 %s322, 4
          %s336 = int_to_ptr.vmem [resolvable:$true] %s335
          %341 = dma.vmem_to_hbm [thread:$0]  %s336, 2048, %s334, %s319, 128, 128, 8
        $region40: #{tpu_custom_call.1} parent=35 // pred_fallthru
          _
      $region36: #{tpu_custom_call.1} parent=5 // pred_fallthru
        _
      %p342 = scmp.le.s32.totalorder 2, %s13
      // Predicated region
      $region41: #{tpu_custom_call.1} parent=5 // pred_check
        %p343 = pneg %p342
      $region42: #{tpu_custom_call.1} parent=5 // pred_check_branch
        %345 = sbr.rel (%p343) target = $region44
      $region43: #{tpu_custom_call.1} parent=5 // pred_region
        %s346 = ssub.s32 %s13, 2
        // Predicated region
        $region45: #{tpu_custom_call.1} parent=43 // pred_check
          %p347 = pneg %p155
        $region46: #{tpu_custom_call.1} parent=43 // pred_check_branch
          %349 = sbr.rel (%p347) target = $region48
        $region47: #{tpu_custom_call.1} parent=43 // pred_region
          %s350 = sand.u32 %s140, 1
          %s351 = scalar_lea.sflag [#allocation3], %s350
          %s352 = sand.u32 %s140, 1
          %s353 = smul.addr %s352, 128
          %s354 = scalar_lea.vmem [#allocation2], %s353
          %355 = dma.done %s351, 2048
        $region48: #{tpu_custom_call.1} parent=43 // pred_fallthru
          _
      $region44: #{tpu_custom_call.1} parent=5 // pred_fallthru
        _
    $region6: #{tpu_custom_call.1} parent=1 // loop_footer
      %s17 = sadd.s32 1, %s13
    $region7: #{tpu_custom_call.1} parent=1 // loop_footer_branch
      %12 = sbr.rel target = $region3
    $region8: #{tpu_custom_call.1} parent=1 // loop_exit
      _
    %356 = vsyncpa [#allocation3], 1
    %s357 = scalar_lea.sflag [#allocation3], 1
    %358 = vsyncpa %s357, 1

</llo_original>
